<compile_context>
chip_gen: v6e
topology: v6e:2x2x1
jax: 0.10.0
libtpu: 0.0.40
codegen_flags: <defaults>
</compile_context>

<pallas_src>
import functools

import jax
import jax.numpy as jnp
from jax.experimental import pallas as pl
from jax.experimental.pallas import tpu as pltpu

LANE = 128


def _round_up(n, m):
    return ((n + m - 1) // m) * m


# ----------------------------------------------------------------------------
# Mask construction (sequential order, mirrors create_masks in the PyTorch ref)
# ----------------------------------------------------------------------------
def create_masks(input_size, hidden_size, n_hidden):
    degrees = [jnp.arange(input_size)]
    for _ in range(n_hidden + 1):
        degrees.append(jnp.arange(hidden_size) % (input_size - 1))
    # Matches PyTorch's `arange(D) % D - 1` (== (arange(D) % D) - 1, i.e.
    # arange(D) - 1): output-layer degrees.  Parenthesized on purpose.
    degrees.append((jnp.arange(input_size) % input_size) - 1)
    masks = []
    for d0, d1 in zip(degrees[:-1], degrees[1:]):
        masks.append((d1[:, None] >= d0[None, :]).astype(jnp.float32))
    return masks, degrees[0]


# ----------------------------------------------------------------------------
# Deterministic parameter init (mimics nn.Linear default + cond_weight init)
# ----------------------------------------------------------------------------
def _init_linear(key, out_features, in_features):
    kw, kb = jax.random.split(key)
    bound = 1.0 / (in_features ** 0.5)
    w = jax.random.uniform(kw, (out_features, in_features), jnp.float32, -bound, bound)
    b = jax.random.uniform(kb, (out_features,), jnp.float32, -bound, bound)
    return w, b


def make_made_params(key, input_size, hidden_size, n_hidden, cond_label_size=None):
    """Pre-masked, transposed (in, out) float32 weights (unpadded)."""
    masks, input_degrees = create_masks(input_size, hidden_size, n_hidden)
    keys = jax.random.split(key, n_hidden + 3)
    params = {}

    # input layer: MaskedLinear(D -> H)
    w, b = _init_linear(keys[0], hidden_size, input_size)
    params["w0"] = (w * masks[0]).T                     # (D, H)
    params["b0"] = b.reshape(1, hidden_size)            # (1, H)
    if cond_label_size is not None:
        cw = jax.random.uniform(
            keys[-1], (hidden_size, cond_label_size), jnp.float32, 0.0, 1.0
        ) / (cond_label_size ** 0.5)
        params["wc"] = cw.T                             # (C, H)

    # hidden layers: n_hidden * MaskedLinear(H -> H)
    hw, hb = [], []
    for li in range(n_hidden):
        w, b = _init_linear(keys[1 + li], hidden_size, hidden_size)
        hw.append((w * masks[1 + li]).T)                # (H, H)
        hb.append(b.reshape(1, hidden_size))            # (1, H)
    params["hw"] = hw
    params["hb"] = hb

    # output layer: MaskedLinear(H -> 2*D), mask tiled over the 2*D rows
    out_mask = jnp.tile(masks[-1], (2, 1))              # (2D, H)
    w, b = _init_linear(keys[1 + n_hidden], 2 * input_size, hidden_size)
    params["wout"] = (w * out_mask).T                   # (H, 2D)
    params["bout"] = b.reshape(1, 2 * input_size)       # (1, 2D)
    return params, input_degrees


def _pad2(a, rows, cols, dtype):
    a = jnp.asarray(a)
    return jnp.pad(a, ((0, rows - a.shape[0]), (0, cols - a.shape[1]))).astype(dtype)


# ----------------------------------------------------------------------------
# One-time weight packing (hoisted out of the forward hot path)
# ----------------------------------------------------------------------------
def pack_made_weights(params, *, compute_dtype=jnp.bfloat16):
    """Pad / cast / fuse the pre-masked weights.  Call ONCE and cache; the
    forward hot path must not re-run this (it is a pure function of the
    parameters and would otherwise cost an extra HBM pass every step)."""
    n_hidden = len(params["hw"])
    D, H = params["w0"].shape
    C = params["wc"].shape[0] if "wc" in params else 0
    d_pad = _round_up(D, LANE)
    h_pad = _round_up(H, LANE)

    # Fused input weight [w0 ; wc] : (D + C, h_pad).  Zero rows/cols beyond
    # the real dims keep the math identical.
    w_in = jnp.zeros((D + C, h_pad), compute_dtype)
    w_in = w_in.at[:D, :H].set(params["w0"].astype(compute_dtype))
    if C:
        w_in = w_in.at[D:, :H].set(params["wc"].astype(compute_dtype))
    b_in = jnp.zeros((1, h_pad), jnp.float32).at[:, :H].set(params["b0"])

    weights = [w_in, b_in]
    for li in range(n_hidden):
        weights.append(_pad2(params["hw"][li], h_pad, h_pad, compute_dtype))
        weights.append(_pad2(params["hb"][li], 1, h_pad, jnp.float32))

    # Output layer: place the m / loga halves at a 128-lane boundary so the
    # in-kernel split is a free lane-aligned slice.
    wout, bout = params["wout"], params["bout"]
    wout_p = jnp.zeros((h_pad, 2 * d_pad), compute_dtype)
    wout_p = wout_p.at[:H, :D].set(wout[:, :D].astype(compute_dtype))
    wout_p = wout_p.at[:H, d_pad:d_pad + D].set(wout[:, D:].astype(compute_dtype))
    bout_p = jnp.zeros((1, 2 * d_pad), jnp.float32)
    bout_p = bout_p.at[:, :D].set(bout[:, :D])
    bout_p = bout_p.at[:, d_pad:d_pad + D].set(bout[:, D:])
    weights += [wout_p, bout_p]

    return dict(weights=weights, D=D, C=C, H=H, d_pad=d_pad, h_pad=h_pad,
                n_hidden=n_hidden, compute_dtype=compute_dtype)


# ----------------------------------------------------------------------------
# Pallas kernel: whole MADE MLP + (x - m) * exp(-loga) epilogue per batch tile
# ----------------------------------------------------------------------------
def _made_kernel(n_hidden, d, d_pad, compute_dtype, *refs):
    xy_ref, w_in_ref, b_in_ref = refs[0], refs[1], refs[2]
    hidden_refs = refs[3:3 + 2 * n_hidden]
    wout_ref = refs[3 + 2 * n_hidden]
    bout_ref = refs[4 + 2 * n_hidden]
    u_ref = refs[5 + 2 * n_hidden]
    nla_ref = refs[6 + 2 * n_hidden]

    xy = xy_ref[...]                                    # f32 (tile_b, D[+C])

    # fused input masked-linear (+ conditioning term); bf16 MXU, f32 acc
    h = jnp.dot(xy.astype(compute_dtype), w_in_ref[...],
                preferred_element_type=jnp.float32) + b_in_ref[...]

    # ReLU (f32) + hidden masked linears
    for li in range(n_hidden):
        w = hidden_refs[2 * li][...]
        b = hidden_refs[2 * li + 1][...]
        h = jnp.dot(jnp.maximum(h, 0.0).astype(compute_dtype), w,
                    preferred_element_type=jnp.float32) + b

    # ReLU + output masked linear -> [ m | loga ], halves lane-aligned at d_pad
    out = jnp.dot(jnp.maximum(h, 0.0).astype(compute_dtype), wout_ref[...],
                  preferred_element_type=jnp.float32) + bout_ref[...]

    x = xy[:, :d]                        # true-x prefix of the fused input
    m = out[:, :d]                       # prefix of the lane-aligned m half
    neg_loga = -out[:, d_pad:d_pad + d]  # lane-aligned start, width d

    # two unpadded (tile_b, d) outputs -> minimal HBM write-back
    u_ref[...] = ((x - m) * jnp.exp(neg_loga)).astype(u_ref.dtype)
    nla_ref[...] = neg_loga.astype(nla_ref.dtype)


# ----------------------------------------------------------------------------
# Forward wrapper
# ----------------------------------------------------------------------------
def made_forward(packed, x, y=None, *, tile_b=512, out_dtype=jnp.float32,
                 use_core_parallel=False, interpret=False):
    D, C = packed["D"], packed["C"]
    d_pad, h_pad = packed["d_pad"], packed["h_pad"]
    n_hidden = packed["n_hidden"]
    compute_dtype = packed["compute_dtype"]
    weights = packed["weights"]

    B = x.shape[0]
    assert x.shape == (B, D)
    if C:
        assert y is not None and y.shape == (B, C)
        # Fused [x | y] operand: one input DMA stream, one MXU matmul for the
        # input layer.  This small (B, D+C) concat is the only host-side copy.
        xy = jnp.concatenate([x.astype(jnp.float32), y.astype(jnp.float32)],
                             axis=-1)
    else:
        xy = x.astype(jnp.float32)
    d_in = D + C

    # Batch tiling: big tiles (default 512 -> multiple of 256 for the v6e/v7x
    # MXU), cdiv grid; the ragged tail tile is handled by Pallas partial-block
    # masking so there is NO host-side batch padding pass.
    tile_b = max(8, _round_up(min(tile_b, _round_up(B, 8)), 8))
    if use_core_parallel:
        # v7x: make sure there are >= 2 tiles so both TensorCores get work.
        while pl.cdiv(B, tile_b) < 2 and tile_b > 8:
            tile_b = max(8, _round_up(tile_b // 2, 8))
    n_tiles = pl.cdiv(B, tile_b)

    in_specs = [pl.BlockSpec((tile_b, d_in), lambda i: (i, 0))]
    # Grid-constant weights: fully VMEM-resident (no per-step DMA).
    weight_spec = pl.BlockSpec(memory_space=pltpu.MemorySpace.VMEM)
    in_specs += [weight_spec] * len(weights)

    out_shape = (jax.ShapeDtypeStruct((B, D), out_dtype),
                 jax.ShapeDtypeStruct((B, D), out_dtype))
    out_specs = [pl.BlockSpec((tile_b, D), lambda i: (i, 0)),
                 pl.BlockSpec((tile_b, D), lambda i: (i, 0))]

    # Derive a VMEM budget; only raise the limit when resident weights + tiles
    # exceed the scoped defaults (16 MiB v5e / 32 MiB v6e, v7x).
    wbytes = sum(int(w.size) * w.dtype.itemsize for w in weights)
    itile = 2 * tile_b * d_in * 4                                  # dbl-buffered
    otile = 2 * 2 * tile_b * D * jnp.dtype(out_dtype).itemsize
    act = 4 * tile_b * max(h_pad, 2 * d_pad) * 4                   # f32 temps
    est = wbytes + itile + otile + act

    cp_kwargs = {"dimension_semantics":
                 ((pltpu.CORE_PARALLEL,) if use_core_parallel else ("parallel",))}
    if est > (24 << 20):
        cp_kwargs["vmem_limit_bytes"] = min(int(est * 1.25) + (8 << 20), 100 << 20)
    # TODO(synk): for very large hidden_size (resident bf16 weights > ~1/2 of
    # v7x's 64 MiB VMEM) switch to a pipelined / K-tiled weight path instead
    # of the fully VMEM-resident weights used here.

    kernel = functools.partial(_made_kernel, n_hidden, D, d_pad, compute_dtype)
    u, neg_loga = pl.pallas_call(
        kernel,
        out_shape=out_shape,
        grid_spec=pltpu.PrefetchScalarGridSpec(
            num_scalar_prefetch=0,
            grid=(n_tiles,),
            in_specs=in_specs,
            out_specs=out_specs,
        ),
        compiler_params=pltpu.CompilerParams(**cp_kwargs),
        interpret=interpret,
    )(xy, *weights)
    return u, neg_loga


# ----------------------------------------------------------------------------
# Pure-JAX reference (same math as PyTorch MADE.forward, mirrored bf16 matmuls)
# ----------------------------------------------------------------------------
def made_forward_ref(params, x, y, compute_dtype=jnp.bfloat16):
    n_hidden = len(params["hw"])
    cd = compute_dtype

    def mm(a, w):
        return jnp.dot(a.astype(cd), w.astype(cd), preferred_element_type=jnp.float32)

    h = mm(x, params["w0"]) + params["b0"]
    if y is not None:
        h = h + mm(y, params["wc"])
    for li in range(n_hidden):
        h = mm(jnp.maximum(h, 0.0), params["hw"][li]) + params["hb"][li]
    out = mm(jnp.maximum(h, 0.0), params["wout"]) + params["bout"]
    D = x.shape[-1]
    m, loga = out[:, :D], out[:, D:]
    return (x - m) * jnp.exp(-loga), -loga


if __name__ == "__main__":
    # TODO(synk): MADE.inverse (sequential per-dim autoregressive loop) and
    # log_prob are not implemented here; only the forward pass is kernelized.
    input_size = 8        # D
    hidden_size = 32      # H
    n_hidden = 2
    cond_label_size = 6   # conditioning label dim
    batch = 200

    key = jax.random.PRNGKey(0)
    kp, kx, ky = jax.random.split(key, 3)
    params, input_degrees = make_made_params(
        kp, input_size, hidden_size, n_hidden, cond_label_size)

    # Hoisted weight prep: pack once, reuse for every forward call.
    packed = pack_made_weights(params)
    packed["weights"] = [jax.block_until_ready(w) for w in packed["weights"]]

    x = jax.random.normal(kx, (batch, input_size), jnp.float32)
    y = jax.random.normal(ky, (batch, cond_label_size), jnp.float32)

    u_ref, ladj_ref = made_forward_ref(params, x, y)

    # 1) default large-tile path (tile_b clamps to the whole small batch)
    u, ladj = made_forward(packed, x, y, tile_b=512)
    u = jax.block_until_ready(u)
    ladj = jax.block_until_ready(ladj)
    assert u.shape == (batch, input_size) and ladj.shape == (batch, input_size)
    assert jnp.allclose(u, u_ref, atol=1e-4, rtol=1e-3), \
        float(jnp.max(jnp.abs(u - u_ref)))
    assert jnp.allclose(ladj, ladj_ref, atol=1e-4, rtol=1e-3), \
        float(jnp.max(jnp.abs(ladj - ladj_ref)))

    # 2) ragged-tail path (tile does not divide the batch -> partial block)
    u2, ladj2 = made_forward(packed, x, y, tile_b=128)
    u2 = jax.block_until_ready(u2)
    ladj2 = jax.block_until_ready(ladj2)
    assert jnp.allclose(u2, u_ref, atol=1e-4, rtol=1e-3), \
        float(jnp.max(jnp.abs(u2 - u_ref)))
    assert jnp.allclose(ladj2, ladj_ref, atol=1e-4, rtol=1e-3), \
        float(jnp.max(jnp.abs(ladj2 - ladj_ref)))

    print("KERNEL_OK")
</pallas_src>

<mosaic_0001>
module attributes {stable_mosaic.version = 11 : i64} {
  func.func @_made_kernel(%arg0: i32, %arg1: memref<200x14xf32, #tpu.memory_space<vmem>>, %arg2: memref<14x128xbf16, #tpu.memory_space<vmem>>, %arg3: memref<1x128xf32, #tpu.memory_space<vmem>>, %arg4: memref<128x128xbf16, #tpu.memory_space<vmem>>, %arg5: memref<1x128xf32, #tpu.memory_space<vmem>>, %arg6: memref<128x128xbf16, #tpu.memory_space<vmem>>, %arg7: memref<1x128xf32, #tpu.memory_space<vmem>>, %arg8: memref<128x256xbf16, #tpu.memory_space<vmem>>, %arg9: memref<1x256xf32, #tpu.memory_space<vmem>>, %arg10: memref<200x8xf32, #tpu.memory_space<vmem>>, %arg11: memref<200x8xf32, #tpu.memory_space<vmem>>) attributes {dimension_semantics = [#tpu.dimension_semantics<parallel>], iteration_bounds = array<i64: 1>, scalar_prefetch = 0 : i64, scratch_operands = 0 : i64, tpu.core_type = #tpu.core_type<tc>, window_params = [{transform_indices = @transform_0, window_bounds = array<i64: 200, 14>}, {pipeline_mode = #tpu.pipeline_mode<synchronous>, transform_indices = @transform_1, window_bounds = array<i64: 14, 128>}, {pipeline_mode = #tpu.pipeline_mode<synchronous>, transform_indices = @transform_2, window_bounds = array<i64: 1, 128>}, {pipeline_mode = #tpu.pipeline_mode<synchronous>, transform_indices = @transform_3, window_bounds = array<i64: 128, 128>}, {pipeline_mode = #tpu.pipeline_mode<synchronous>, transform_indices = @transform_4, window_bounds = array<i64: 1, 128>}, {pipeline_mode = #tpu.pipeline_mode<synchronous>, transform_indices = @transform_5, window_bounds = array<i64: 128, 128>}, {pipeline_mode = #tpu.pipeline_mode<synchronous>, transform_indices = @transform_6, window_bounds = array<i64: 1, 128>}, {pipeline_mode = #tpu.pipeline_mode<synchronous>, transform_indices = @transform_7, window_bounds = array<i64: 128, 256>}, {pipeline_mode = #tpu.pipeline_mode<synchronous>, transform_indices = @transform_8, window_bounds = array<i64: 1, 256>}, {transform_indices = @transform_9, window_bounds = array<i64: 200, 8>}, {transform_indices = @transform_10, window_bounds = array<i64: 200, 8>}]} {
    %c0 = arith.constant 0 : index
    %c0_0 = arith.constant 0 : index
    %0 = vector.load %arg1[%c0, %c0_0] : memref<200x14xf32, #tpu.memory_space<vmem>>, vector<200x14xf32>
    %1 = arith.truncf %0 : vector<200x14xf32> to vector<200x14xbf16>
    %c0_1 = arith.constant 0 : index
    %c0_2 = arith.constant 0 : index
    %2 = vector.load %arg2[%c0_1, %c0_2] : memref<14x128xbf16, #tpu.memory_space<vmem>>, vector<14x128xbf16>
    %cst = arith.constant dense<0.000000e+00> : vector<200x128xf32>
    %3 = tpu.matmul %1, %2, %cst {dimension_numbers = #tpu.dot_dimension_numbers<[1], [0], [0], [1], [0, 0, 1, 1], [], []>} : vector<200x14xbf16>, vector<14x128xbf16>, vector<200x128xf32> -> vector<200x128xf32>
    %c0_3 = arith.constant 0 : index
    %c0_4 = arith.constant 0 : index
    %4 = vector.load %arg3[%c0_3, %c0_4] : memref<1x128xf32, #tpu.memory_space<vmem>>, vector<1x128xf32>
    %5 = vector.broadcast %4 : vector<1x128xf32> to vector<200x128xf32>
    %6 = arith.addf %3, %5 : vector<200x128xf32>
    %c0_5 = arith.constant 0 : index
    %c0_6 = arith.constant 0 : index
    %7 = vector.load %arg4[%c0_5, %c0_6] : memref<128x128xbf16, #tpu.memory_space<vmem>>, vector<128x128xbf16>
    %c0_7 = arith.constant 0 : index
    %c0_8 = arith.constant 0 : index
    %8 = vector.load %arg5[%c0_7, %c0_8] : memref<1x128xf32, #tpu.memory_space<vmem>>, vector<1x128xf32>
    %cst_9 = arith.constant 0.000000e+00 : f32
    %9 = vector.broadcast %cst_9 : f32 to vector<200x128xf32>
    %10 = arith.maximumf %6, %9 : vector<200x128xf32>
    %11 = arith.truncf %10 : vector<200x128xf32> to vector<200x128xbf16>
    %cst_10 = arith.constant dense<0.000000e+00> : vector<200x128xf32>
    %12 = tpu.matmul %11, %7, %cst_10 {dimension_numbers = #tpu.dot_dimension_numbers<[1], [0], [0], [1], [0, 0, 1, 1], [], []>} : vector<200x128xbf16>, vector<128x128xbf16>, vector<200x128xf32> -> vector<200x128xf32>
    %13 = vector.broadcast %8 : vector<1x128xf32> to vector<200x128xf32>
    %14 = arith.addf %12, %13 : vector<200x128xf32>
    %c0_11 = arith.constant 0 : index
    %c0_12 = arith.constant 0 : index
    %15 = vector.load %arg6[%c0_11, %c0_12] : memref<128x128xbf16, #tpu.memory_space<vmem>>, vector<128x128xbf16>
    %c0_13 = arith.constant 0 : index
    %c0_14 = arith.constant 0 : index
    %16 = vector.load %arg7[%c0_13, %c0_14] : memref<1x128xf32, #tpu.memory_space<vmem>>, vector<1x128xf32>
    %cst_15 = arith.constant 0.000000e+00 : f32
    %17 = vector.broadcast %cst_15 : f32 to vector<200x128xf32>
    %18 = arith.maximumf %14, %17 : vector<200x128xf32>
    %19 = arith.truncf %18 : vector<200x128xf32> to vector<200x128xbf16>
    %cst_16 = arith.constant dense<0.000000e+00> : vector<200x128xf32>
    %20 = tpu.matmul %19, %15, %cst_16 {dimension_numbers = #tpu.dot_dimension_numbers<[1], [0], [0], [1], [0, 0, 1, 1], [], []>} : vector<200x128xbf16>, vector<128x128xbf16>, vector<200x128xf32> -> vector<200x128xf32>
    %21 = vector.broadcast %16 : vector<1x128xf32> to vector<200x128xf32>
    %22 = arith.addf %20, %21 : vector<200x128xf32>
    %cst_17 = arith.constant 0.000000e+00 : f32
    %23 = vector.broadcast %cst_17 : f32 to vector<200x128xf32>
    %24 = arith.maximumf %22, %23 : vector<200x128xf32>
    %25 = arith.truncf %24 : vector<200x128xf32> to vector<200x128xbf16>
    %c0_18 = arith.constant 0 : index
    %c0_19 = arith.constant 0 : index
    %26 = vector.load %arg8[%c0_18, %c0_19] : memref<128x256xbf16, #tpu.memory_space<vmem>>, vector<128x256xbf16>
    %cst_20 = arith.constant dense<0.000000e+00> : vector<200x256xf32>
    %27 = tpu.matmul %25, %26, %cst_20 {dimension_numbers = #tpu.dot_dimension_numbers<[1], [0], [0], [1], [0, 0, 1, 1], [], []>} : vector<200x128xbf16>, vector<128x256xbf16>, vector<200x256xf32> -> vector<200x256xf32>
    %c0_21 = arith.constant 0 : index
    %c0_22 = arith.constant 0 : index
    %28 = vector.load %arg9[%c0_21, %c0_22] : memref<1x256xf32, #tpu.memory_space<vmem>>, vector<1x256xf32>
    %29 = vector.broadcast %28 : vector<1x256xf32> to vector<200x256xf32>
    %30 = arith.addf %27, %29 : vector<200x256xf32>
    %31 = vector.extract_strided_slice %0 {offsets = [0, 0], sizes = [200, 8], strides = [1, 1]} : vector<200x14xf32> to vector<200x8xf32>
    %32 = vector.extract_strided_slice %30 {offsets = [0, 0], sizes = [200, 8], strides = [1, 1]} : vector<200x256xf32> to vector<200x8xf32>
    %33 = vector.extract_strided_slice %30 {offsets = [0, 128], sizes = [200, 8], strides = [1, 1]} : vector<200x256xf32> to vector<200x8xf32>
    %cst_23 = arith.constant 0.000000e+00 : f32
    %34 = vector.broadcast %cst_23 : f32 to vector<200x8xf32>
    %35 = arith.subf %34, %33 : vector<200x8xf32>
    %36 = arith.subf %31, %32 : vector<200x8xf32>
    %37 = math.exp %35 : vector<200x8xf32>
    %38 = arith.mulf %36, %37 : vector<200x8xf32>
    %c0_24 = arith.constant 0 : index
    %c0_25 = arith.constant 0 : index
    %39 = vector.load %arg10[%c0_24, %c0_25] : memref<200x8xf32, #tpu.memory_space<vmem>>, vector<200x8xf32>
    tpu.vector_store %arg10[%c0_24, %c0_25], %38 {strides = array<i32>} : memref<200x8xf32, #tpu.memory_space<vmem>>, vector<200x8xf32>,
    %c0_26 = arith.constant 0 : index
    %c0_27 = arith.constant 0 : index
    %40 = vector.load %arg11[%c0_26, %c0_27] : memref<200x8xf32, #tpu.memory_space<vmem>>, vector<200x8xf32>
    tpu.vector_store %arg11[%c0_26, %c0_27], %35 {strides = array<i32>} : memref<200x8xf32, #tpu.memory_space<vmem>>, vector<200x8xf32>,
    return
  }
  func.func @transform_0(%arg0: i32) -> (i32, i32) {
    %c0_i32 = arith.constant 0 : i32
    %c0_i32_0 = arith.constant 0 : i32
    return %arg0, %c0_i32 : i32, i32
  }
  func.func @transform_1(%arg0: i32) -> (i32, i32) {
    %c0_i32 = arith.constant 0 : i32
    %c0_i32_0 = arith.constant 0 : i32
    %c0_i32_1 = arith.constant 0 : i32
    return %c0_i32, %c0_i32_0 : i32, i32
  }
  func.func @transform_2(%arg0: i32) -> (i32, i32) {
    %c0_i32 = arith.constant 0 : i32
    %c0_i32_0 = arith.constant 0 : i32
    %c0_i32_1 = arith.constant 0 : i32
    return %c0_i32, %c0_i32_0 : i32, i32
  }
  func.func @transform_3(%arg0: i32) -> (i32, i32) {
    %c0_i32 = arith.constant 0 : i32
    %c0_i32_0 = arith.constant 0 : i32
    %c0_i32_1 = arith.constant 0 : i32
    return %c0_i32, %c0_i32_0 : i32, i32
  }
  func.func @transform_4(%arg0: i32) -> (i32, i32) {
    %c0_i32 = arith.constant 0 : i32
    %c0_i32_0 = arith.constant 0 : i32
    %c0_i32_1 = arith.constant 0 : i32
    return %c0_i32, %c0_i32_0 : i32, i32
  }
  func.func @transform_5(%arg0: i32) -> (i32, i32) {
    %c0_i32 = arith.constant 0 : i32
    %c0_i32_0 = arith.constant 0 : i32
    %c0_i32_1 = arith.constant 0 : i32
    return %c0_i32, %c0_i32_0 : i32, i32
  }
  func.func @transform_6(%arg0: i32) -> (i32, i32) {
    %c0_i32 = arith.constant 0 : i32
    %c0_i32_0 = arith.constant 0 : i32
    %c0_i32_1 = arith.constant 0 : i32
    return %c0_i32, %c0_i32_0 : i32, i32
  }
  func.func @transform_7(%arg0: i32) -> (i32, i32) {
    %c0_i32 = arith.constant 0 : i32
    %c0_i32_0 = arith.constant 0 : i32
    %c0_i32_1 = arith.constant 0 : i32
    return %c0_i32, %c0_i32_0 : i32, i32
  }
  func.func @transform_8(%arg0: i32) -> (i32, i32) {
    %c0_i32 = arith.constant 0 : i32
    %c0_i32_0 = arith.constant 0 : i32
    %c0_i32_1 = arith.constant 0 : i32
    return %c0_i32, %c0_i32_0 : i32, i32
  }
  func.func @transform_9(%arg0: i32) -> (i32, i32) {
    %c0_i32 = arith.constant 0 : i32
    %c0_i32_0 = arith.constant 0 : i32
    return %arg0, %c0_i32 : i32, i32
  }
  func.func @transform_10(%arg0: i32) -> (i32, i32) {
    %c0_i32 = arith.constant 0 : i32
    %c0_i32_0 = arith.constant 0 : i32
    return %arg0, %c0_i32 : i32, i32
  }
}

</mosaic_0001>

<llo_original>
// kernel: tpu_custom_call.1
$region0: #{tpu_custom_call.1}
  #allocation0 [shape = 'u32[]', space=smem, size = 0x4, offset = 0x4, fixed_abs, tag = 'smem constant byte address 0x4 - core index']
  #allocation1 [shape = 'u32[144,128]{1,0:T(1,128)}', space=vmem, size = 0x12000, scoped, tag = 'internal scratch']
  %s0 = inlined_call_operand.vmem [shape: f32[200,14], index: 0, kind: input, shape index: {}]
  %s1 = inlined_call_operand.vmem [shape: bf16[14,128], index: 1, kind: input, shape index: {}]
  %s2 = inlined_call_operand.vmem [shape: f32[1,128], index: 2, kind: input, shape index: {}]
  %s3 = inlined_call_operand.vmem [shape: bf16[128,128], index: 3, kind: input, shape index: {}]
  %s4 = inlined_call_operand.vmem [shape: f32[1,128], index: 4, kind: input, shape index: {}]
  %s5 = inlined_call_operand.hbm [shape: bf16[128,128], index: 5, kind: input, shape index: {}]
  %s6 = inlined_call_operand.vmem [shape: f32[1,128], index: 6, kind: input, shape index: {}]
  %s7 = inlined_call_operand.vmem [shape: bf16[128,256], index: 7, kind: input, shape index: {}]
  %s8 = inlined_call_operand.vmem [shape: f32[1,256], index: 8, kind: input, shape index: {}]
  %s9 = inlined_call_operand.vmem [shape: f32[200,8], index: 9, kind: output, shape index: {0}]
  %s10 = inlined_call_operand.vmem [shape: f32[200,8], index: 10, kind: output, shape index: {1}]
  %11 = xla_tuple %s9, %s10
  %s12 = sld [smem:[#allocation0]]
  $region58: #{tpu_custom_call.1} parent=0
    _
  %s14 = ssub.s32 1, %s12
  %s15 = scalar_select 0, %s14, %s12
  $region1: #{tpu_custom_call.1} parent=0
    #allocation2 [shape = 'u8[32768]{0}', space=vmem, size = 0x8000, scoped, tag = 'input window, operand 5, single buffered']
    #allocation3 [shape = 's32[1]{0}', space=sflag, size = 0x4, scoped, tag = 'scoped memory for tpu_custom_call.1']
    %16 = vsyncpa [#allocation3], 0
    // Predicated region
    $region2: #{tpu_custom_call.1} parent=1 // pred_check
      _
    $region3: #{tpu_custom_call.1} parent=1 // pred_check_branch
      %18 = sbr.rel (0) target = $region5
    $region4: #{tpu_custom_call.1} parent=1 // pred_region
      _
    $region5: #{tpu_custom_call.1} parent=1 // pred_fallthru
      _
    // Predicated region
    $region6: #{tpu_custom_call.1} parent=1 // pred_check
      _
    $region7: #{tpu_custom_call.1} parent=1 // pred_check_branch
      %20 = sbr.rel (0) target = $region9
    $region8: #{tpu_custom_call.1} parent=1 // pred_region
      _
    $region9: #{tpu_custom_call.1} parent=1 // pred_fallthru
      _
    // Predicated region
    $region10: #{tpu_custom_call.1} parent=1 // pred_check
      _
    $region11: #{tpu_custom_call.1} parent=1 // pred_check_branch
      %22 = sbr.rel (0) target = $region13
    $region12: #{tpu_custom_call.1} parent=1 // pred_region
      _
    $region13: #{tpu_custom_call.1} parent=1 // pred_fallthru
      _
    // Predicated region
    $region14: #{tpu_custom_call.1} parent=1 // pred_check
      _
    $region15: #{tpu_custom_call.1} parent=1 // pred_check_branch
      %24 = sbr.rel (0) target = $region17
    $region16: #{tpu_custom_call.1} parent=1 // pred_region
      _
    $region17: #{tpu_custom_call.1} parent=1 // pred_fallthru
      _
    // Predicated region
    $region18: #{tpu_custom_call.1} parent=1 // pred_check
      _
    $region19: #{tpu_custom_call.1} parent=1 // pred_check_branch
      %26 = sbr.rel (0) target = $region21
    $region20: #{tpu_custom_call.1} parent=1 // pred_region
      _
    $region21: #{tpu_custom_call.1} parent=1 // pred_fallthru
      _
    // Predicated region
    $region22: #{tpu_custom_call.1} parent=1 // pred_check
      _
    $region23: #{tpu_custom_call.1} parent=1 // pred_check_branch
      %28 = sbr.rel (0) target = $region25
    $region24: #{tpu_custom_call.1} parent=1 // pred_region
      %s30 = ssub.s32 1024, 1024
      %31 = vsyncadd [#allocation3], %s30
      %s32 = sshll.u32 [#allocation2], 4
      %s33 = int_to_ptr.vmem [resolvable:$true] %s32
      %38 = dma.hbm_to_vmem [thread:$0]  %s5, 1024, %s33, [#allocation3], 64, 64, 4
    $region25: #{tpu_custom_call.1} parent=1 // pred_fallthru
      _
    // Predicated region
    $region26: #{tpu_custom_call.1} parent=1 // pred_check
      _
    $region27: #{tpu_custom_call.1} parent=1 // pred_check_branch
      %40 = sbr.rel (0) target = $region29
    $region28: #{tpu_custom_call.1} parent=1 // pred_region
      _
    $region29: #{tpu_custom_call.1} parent=1 // pred_fallthru
      _
    // Predicated region
    $region30: #{tpu_custom_call.1} parent=1 // pred_check
      _
    $region31: #{tpu_custom_call.1} parent=1 // pred_check_branch
      %42 = sbr.rel (0) target = $region33
    $region32: #{tpu_custom_call.1} parent=1 // pred_region
      _
    $region33: #{tpu_custom_call.1} parent=1 // pred_fallthru
      _
    // Predicated region
    $region34: #{tpu_custom_call.1} parent=1 // pred_check
      _
    $region35: #{tpu_custom_call.1} parent=1 // pred_check_branch
      %44 = sbr.rel (0) target = $region37
    $region36: #{tpu_custom_call.1} parent=1 // pred_region
      _
    $region37: #{tpu_custom_call.1} parent=1 // pred_fallthru
      _
    // Predicated region
    $region38: #{tpu_custom_call.1} parent=1 // pred_check
      _
    $region39: #{tpu_custom_call.1} parent=1 // pred_check_branch
      %46 = sbr.rel (0) target = $region41
    $region40: #{tpu_custom_call.1} parent=1 // pred_region
      %47 = dma.done [#allocation3], 1024
    $region41: #{tpu_custom_call.1} parent=1 // pred_fallthru
      _
    %v49 = vld [vmem:[%s0] sm:$0xff]
    %v50 = vld [vmem:[%s0 + $0x8] sm:$0xff]
    %v51 = vld [vmem:[%s0 + $0x10] sm:$0xff]
    %v52 = vld [vmem:[%s0 + $0x18] sm:$0xff]
    %v53 = vld [vmem:[%s0 + $0x20] sm:$0xff]
    %v54 = vld [vmem:[%s0 + $0x28] sm:$0xff]
    %v55 = vld [vmem:[%s0 + $0x30] sm:$0xff]
    %v56 = vld [vmem:[%s0 + $0x38] sm:$0xff]
    %v57 = vld [vmem:[%s0 + $0x40] sm:$0xff]
    %v58 = vld [vmem:[%s0 + $0x48] sm:$0xff]
    %v59 = vld [vmem:[%s0 + $0x50] sm:$0xff]
    %v60 = vld [vmem:[%s0 + $0x58] sm:$0xff]
    %v61 = vld [vmem:[%s0 + $0x60] sm:$0xff]
    %v62 = vld [vmem:[%s0 + $0x68] sm:$0xff]
    %v63 = vld [vmem:[%s0 + $0x70] sm:$0xff]
    %v64 = vld [vmem:[%s0 + $0x78] sm:$0xff]
    %v65 = vld [vmem:[%s0 + $0x80] sm:$0xff]
    %v66 = vld [vmem:[%s0 + $0x88] sm:$0xff]
    %v67 = vld [vmem:[%s0 + $0x90] sm:$0xff]
    %v68 = vld [vmem:[%s0 + $0x98] sm:$0xff]
    %v69 = vld [vmem:[%s0 + $0xa0] sm:$0xff]
    %v70 = vld [vmem:[%s0 + $0xa8] sm:$0xff]
    %v71 = vld [vmem:[%s0 + $0xb0] sm:$0xff]
    %v72 = vld [vmem:[%s0 + $0xb8] sm:$0xff]
    %v73 = vld [vmem:[%s0 + $0xc0] sm:$0xff]
    %v74 = vpack.c.bf16 %v50, %v49
    %v75 = vpack.c.bf16 %v52, %v51
    %v76 = vpack.c.bf16 %v54, %v53
    %v77 = vpack.c.bf16 %v56, %v55
    %v78 = vpack.c.bf16 %v58, %v57
    %v79 = vpack.c.bf16 %v60, %v59
    %v80 = vpack.c.bf16 %v62, %v61
    %v81 = vpack.c.bf16 %v64, %v63
    %v82 = vpack.c.bf16 %v66, %v65
    %v83 = vpack.c.bf16 %v68, %v67
    %v84 = vpack.c.bf16 %v70, %v69
    %v85 = vpack.c.bf16 %v72, %v71
    %v86 = vpack.c.bf16 %v73, %v73
    %v87 = vld [vmem:[%s1] sm:$0xf]
    %v88 = vld [vmem:[%s1 + $0x4] sm:$0x7]
    %v89 = vld [vmem:[%s2] sm:$0x1]
    %v91 = vlaneseq
    %v92 = vshrl.u32 %v91, 7
    %v93 = vsub.s32 0, %v92
    %v94 = vrot.slane %v89, %v93
    %v98 = vunpack.c.l.b16 %v87
    %v99 = vunpack.c.l.b16 %v88
    %v100 = vpack.c.b16 %v99, %v98
    %vm101 = vcmask 113664
    %v103 = vsel %vm101, %v74, 0
    %v106 = vsel %vm101, %v75, 0
    %v109 = vsel %vm101, %v76, 0
    %v112 = vsel %vm101, %v77, 0
    %v115 = vsel %vm101, %v78, 0
    %v118 = vsel %vm101, %v79, 0
    %v121 = vsel %vm101, %v80, 0
    %v124 = vsel %vm101, %v81, 0
    %v127 = vsel %vm101, %v82, 0
    %v130 = vsel %vm101, %v83, 0
    %v133 = vsel %vm101, %v84, 0
    %v136 = vsel %vm101, %v85, 0
    %v139 = vsel %vm101, %v86, 0
    %vm141 = vcmask 1046528
    %v143 = vsel %vm141, %v100, 0
    %145 = vmatprep.subr.bf16.mxu0 0
    %146 = vmatpush1.bf16.msra.mxu0 0
    %147 = vmatprep.subr.bf16.mxu0 0
    %148 = vmatpush1.bf16.msra.mxu0 0
    %149 = vmatprep.subr.bf16.mxu0 0
    %150 = vmatpush1.bf16.msra.mxu0 0
    %151 = vmatprep.subr.bf16.mxu0 0
    %152 = vmatpush1.bf16.msra.mxu0 0
    %153 = vmatprep.subr.bf16.mxu0 0
    %154 = vmatpush1.bf16.msra.mxu0 0
    %155 = vmatprep.subr.bf16.mxu0 0
    %156 = vmatpush1.bf16.msra.mxu0 0
    %157 = vmatprep.subr.bf16.mxu0 0
    %158 = vmatpush1.bf16.msra.mxu0 0
    %159 = vmatprep.subr.bf16.mxu0 0
    %160 = vmatpush1.bf16.msra.mxu0 %v143
    %161 = vmatprep.subr.bf16.mxu0 0
    %162 = vmatpush2.bf16.msra.mxu0 0
    %163 = vmatprep.subr.bf16.mxu0 0
    %164 = vmatpush2.bf16.msra.mxu0 0
    %165 = vmatprep.subr.bf16.mxu0 0
    %166 = vmatpush2.bf16.msra.mxu0 0
    %167 = vmatprep.subr.bf16.mxu0 0
    %168 = vmatpush2.bf16.msra.mxu0 0
    %169 = vmatprep.subr.bf16.mxu0 0
    %170 = vmatpush2.bf16.msra.mxu0 0
    %171 = vmatprep.subr.bf16.mxu0 0
    %172 = vmatpush2.bf16.msra.mxu0 0
    %173 = vmatprep.subr.bf16.mxu0 0
    %174 = vmatpush2.bf16.msra.mxu0 0
    %175 = vmatprep.subr.bf16.mxu0 0
    %176 = vmatpush2.bf16.msra.mxu0 0
    %177 = vmatprep.mubr.bf16.mxu0 0
    %178 = vmatmul.mubr.bf16.gmra.mxu0 %v103
    %v179 = vpop.f32.mrf.mxu0
    %v180 = vadd.f32 %v94, %v179
    %v181 = vpop.f32.mrf.mxu0
    %v182 = vpop.f32.mrf.mxu0
    %v183 = vadd.f32 %v94, %v182
    %v184 = vpop.f32.mrf.mxu0
    %185 = vmatprep.mubr.bf16.mxu0 0
    %186 = vmatmul.mubr.bf16.gmra.mxu0 %v106
    %v187 = vpop.f32.mrf.mxu0
    %v188 = vadd.f32 %v94, %v187
    %v189 = vpop.f32.mrf.mxu0
    %v190 = vpop.f32.mrf.mxu0
    %v191 = vadd.f32 %v94, %v190
    %v192 = vpop.f32.mrf.mxu0
    %193 = vmatprep.mubr.bf16.mxu0 0
    %194 = vmatmul.mubr.bf16.gmra.mxu0 %v109
    %v195 = vpop.f32.mrf.mxu0
    %v196 = vadd.f32 %v94, %v195
    %v197 = vpop.f32.mrf.mxu0
    %v198 = vpop.f32.mrf.mxu0
    %v199 = vadd.f32 %v94, %v198
    %v200 = vpop.f32.mrf.mxu0
    %201 = vmatprep.mubr.bf16.mxu0 0
    %202 = vmatmul.mubr.bf16.gmra.mxu0 %v112
    %v203 = vpop.f32.mrf.mxu0
    %v204 = vadd.f32 %v94, %v203
    %v205 = vpop.f32.mrf.mxu0
    %v206 = vpop.f32.mrf.mxu0
    %v207 = vadd.f32 %v94, %v206
    %v208 = vpop.f32.mrf.mxu0
    %209 = vmatprep.mubr.bf16.mxu0 0
    %210 = vmatmul.mubr.bf16.gmra.mxu0 %v115
    %v211 = vpop.f32.mrf.mxu0
    %v212 = vadd.f32 %v94, %v211
    %v213 = vpop.f32.mrf.mxu0
    %v214 = vpop.f32.mrf.mxu0
    %v215 = vadd.f32 %v94, %v214
    %v216 = vpop.f32.mrf.mxu0
    %217 = vmatprep.mubr.bf16.mxu0 0
    %218 = vmatmul.mubr.bf16.gmra.mxu0 %v118
    %v219 = vpop.f32.mrf.mxu0
    %v220 = vadd.f32 %v94, %v219
    %v221 = vpop.f32.mrf.mxu0
    %v222 = vpop.f32.mrf.mxu0
    %v223 = vadd.f32 %v94, %v222
    %v224 = vpop.f32.mrf.mxu0
    %225 = vmatprep.mubr.bf16.mxu0 0
    %226 = vmatmul.mubr.bf16.gmra.mxu0 %v121
    %v227 = vpop.f32.mrf.mxu0
    %v228 = vadd.f32 %v94, %v227
    %v229 = vpop.f32.mrf.mxu0
    %v230 = vpop.f32.mrf.mxu0
    %v231 = vadd.f32 %v94, %v230
    %v232 = vpop.f32.mrf.mxu0
    %233 = vmatprep.mubr.bf16.mxu0 0
    %234 = vmatmul.mubr.bf16.gmra.mxu0 %v124
    %v235 = vpop.f32.mrf.mxu0
    %v236 = vadd.f32 %v94, %v235
    %v237 = vpop.f32.mrf.mxu0
    %v238 = vpop.f32.mrf.mxu0
    %v239 = vadd.f32 %v94, %v238
    %v240 = vpop.f32.mrf.mxu0
    %241 = vmatprep.mubr.bf16.mxu0 0
    %242 = vmatmul.mubr.bf16.gmra.mxu0 %v127
    %v243 = vpop.f32.mrf.mxu0
    %v244 = vadd.f32 %v94, %v243
    %v245 = vpop.f32.mrf.mxu0
    %v246 = vpop.f32.mrf.mxu0
    %v247 = vadd.f32 %v94, %v246
    %v248 = vpop.f32.mrf.mxu0
    %249 = vmatprep.mubr.bf16.mxu0 0
    %250 = vmatmul.mubr.bf16.gmra.mxu0 %v130
    %v251 = vpop.f32.mrf.mxu0
    %v252 = vadd.f32 %v94, %v251
    %v253 = vpop.f32.mrf.mxu0
    %v254 = vpop.f32.mrf.mxu0
    %v255 = vadd.f32 %v94, %v254
    %v256 = vpop.f32.mrf.mxu0
    %257 = vmatprep.mubr.bf16.mxu0 0
    %258 = vmatmul.mubr.bf16.gmra.mxu0 %v133
    %v259 = vpop.f32.mrf.mxu0
    %v260 = vadd.f32 %v94, %v259
    %v261 = vpop.f32.mrf.mxu0
    %v262 = vpop.f32.mrf.mxu0
    %v263 = vadd.f32 %v94, %v262
    %v264 = vpop.f32.mrf.mxu0
    %265 = vmatprep.mubr.bf16.mxu0 0
    %266 = vmatmul.mubr.bf16.gmra.mxu0 %v136
    %v267 = vpop.f32.mrf.mxu0
    %v268 = vadd.f32 %v94, %v267
    %v269 = vpop.f32.mrf.mxu0
    %v270 = vpop.f32.mrf.mxu0
    %v271 = vadd.f32 %v94, %v270
    %v272 = vpop.f32.mrf.mxu0
    %273 = vmatprep.mubr.bf16.mxu0 0
    %274 = vmatmul.mubr.bf16.gmra.mxu0 %v139
    %v275 = vpop.f32.mrf.mxu0
    %v276 = vadd.f32 %v94, %v275
    %v277 = vpop.f32.mrf.mxu0
    %v278 = vpop.f32.mrf.mxu0
    %v279 = vpop.f32.mrf.mxu0
    %280 = vdwg.mxu0
    %v281 = vld [vmem:[%s3] sm:$0xf]
    %v282 = vld [vmem:[%s3 + $0x4] sm:$0xf]
    %v283 = vld [vmem:[%s3 + $0x8] sm:$0xf]
    %v284 = vld [vmem:[%s3 + $0xc] sm:$0xf]
    %v285 = vld [vmem:[%s3 + $0x10] sm:$0xf]
    %v286 = vld [vmem:[%s3 + $0x14] sm:$0xf]
    %v287 = vld [vmem:[%s3 + $0x18] sm:$0xf]
    %v288 = vld [vmem:[%s3 + $0x1c] sm:$0xf]
    %v289 = vld [vmem:[%s3 + $0x20] sm:$0xf]
    %v290 = vld [vmem:[%s3 + $0x24] sm:$0xf]
    %v291 = vld [vmem:[%s3 + $0x28] sm:$0xf]
    %v292 = vld [vmem:[%s3 + $0x2c] sm:$0xf]
    %v293 = vld [vmem:[%s3 + $0x30] sm:$0xf]
    %v294 = vld [vmem:[%s3 + $0x34] sm:$0xf]
    %v295 = vld [vmem:[%s3 + $0x38] sm:$0xf]
    %v296 = vld [vmem:[%s3 + $0x3c] sm:$0xf]
    %v297 = vld [vmem:[%s4] sm:$0x1]
    %v298 = vmax.f32 %v180, 0.0
    %v299 = vmax.f32 %v183, 0.0
    %v300 = vmax.f32 %v188, 0.0
    %v301 = vmax.f32 %v191, 0.0
    %v302 = vmax.f32 %v196, 0.0
    %v303 = vmax.f32 %v199, 0.0
    %v304 = vmax.f32 %v204, 0.0
    %v305 = vmax.f32 %v207, 0.0
    %v306 = vmax.f32 %v212, 0.0
    %v307 = vmax.f32 %v215, 0.0
    %v308 = vmax.f32 %v220, 0.0
    %v309 = vmax.f32 %v223, 0.0
    %v310 = vmax.f32 %v228, 0.0
    %v311 = vmax.f32 %v231, 0.0
    %v312 = vmax.f32 %v236, 0.0
    %v313 = vmax.f32 %v239, 0.0
    %v314 = vmax.f32 %v244, 0.0
    %v315 = vmax.f32 %v247, 0.0
    %v316 = vmax.f32 %v252, 0.0
    %v317 = vmax.f32 %v255, 0.0
    %v318 = vmax.f32 %v260, 0.0
    %v319 = vmax.f32 %v263, 0.0
    %v320 = vmax.f32 %v268, 0.0
    %v321 = vmax.f32 %v271, 0.0
    %v322 = vmax.f32 %v276, 0.0
    %v323 = vpack.c.bf16 %v299, %v298
    %v324 = vpack.c.bf16 %v301, %v300
    %v325 = vpack.c.bf16 %v303, %v302
    %v326 = vpack.c.bf16 %v305, %v304
    %v327 = vpack.c.bf16 %v307, %v306
    %v328 = vpack.c.bf16 %v309, %v308
    %v329 = vpack.c.bf16 %v311, %v310
    %v330 = vpack.c.bf16 %v313, %v312
    %v331 = vpack.c.bf16 %v315, %v314
    %v332 = vpack.c.bf16 %v317, %v316
    %v333 = vpack.c.bf16 %v319, %v318
    %v334 = vpack.c.bf16 %v321, %v320
    %v335 = vpack.c.bf16 %v322, %v322
    %v337 = vlaneseq
    %v338 = vshrl.u32 %v337, 7
    %v339 = vsub.s32 0, %v338
    %v340 = vrot.slane %v297, %v339
    %v358 = vunpack.c.l.b16 %v281
    %v359 = vunpack.c.l.b16 %v282
    %v360 = vunpack.c.l.b16 %v283
    %v361 = vunpack.c.l.b16 %v284
    %v362 = vunpack.c.l.b16 %v285
    %v363 = vunpack.c.l.b16 %v286
    %v364 = vunpack.c.l.b16 %v287
    %v365 = vunpack.c.l.b16 %v288
    %v366 = vunpack.c.l.b16 %v289
    %v367 = vunpack.c.l.b16 %v290
    %v368 = vunpack.c.l.b16 %v291
    %v369 = vunpack.c.l.b16 %v292
    %v370 = vunpack.c.l.b16 %v293
    %v371 = vunpack.c.l.b16 %v294
    %v372 = vunpack.c.l.b16 %v295
    %v373 = vunpack.c.l.b16 %v296
    %v374 = vpack.c.b16 %v359, %v358
    %v375 = vpack.c.b16 %v361, %v360
    %v376 = vpack.c.b16 %v363, %v362
    %v377 = vpack.c.b16 %v365, %v364
    %v378 = vpack.c.b16 %v367, %v366
    %v379 = vpack.c.b16 %v369, %v368
    %v380 = vpack.c.b16 %v371, %v370
    %v381 = vpack.c.b16 %v373, %v372
    %390 = vmatprep.subr.bf16.mxu0 0
    %391 = vmatpush1.bf16.msra.mxu0 %v381
    %392 = vmatprep.subr.bf16.mxu0 0
    %393 = vmatpush1.bf16.msra.mxu0 %v380
    %394 = vmatprep.subr.bf16.mxu0 0
    %395 = vmatpush1.bf16.msra.mxu0 %v379
    %396 = vmatprep.subr.bf16.mxu0 0
    %397 = vmatpush1.bf16.msra.mxu0 %v378
    %398 = vmatprep.subr.bf16.mxu0 0
    %399 = vmatpush1.bf16.msra.mxu0 %v377
    %400 = vmatprep.subr.bf16.mxu0 0
    %401 = vmatpush1.bf16.msra.mxu0 %v376
    %402 = vmatprep.subr.bf16.mxu0 0
    %403 = vmatpush1.bf16.msra.mxu0 %v375
    %404 = vmatprep.subr.bf16.mxu0 0
    %405 = vmatpush1.bf16.msra.mxu0 %v374
    %406 = vmatprep.subr.bf16.mxu0 0
    %407 = vmatpush2.bf16.msra.mxu0 0
    %408 = vmatprep.subr.bf16.mxu0 0
    %409 = vmatpush2.bf16.msra.mxu0 0
    %410 = vmatprep.subr.bf16.mxu0 0
    %411 = vmatpush2.bf16.msra.mxu0 0
    %412 = vmatprep.subr.bf16.mxu0 0
    %413 = vmatpush2.bf16.msra.mxu0 0
    %414 = vmatprep.subr.bf16.mxu0 0
    %415 = vmatpush2.bf16.msra.mxu0 0
    %416 = vmatprep.subr.bf16.mxu0 0
    %417 = vmatpush2.bf16.msra.mxu0 0
    %418 = vmatprep.subr.bf16.mxu0 0
    %419 = vmatpush2.bf16.msra.mxu0 0
    %420 = vmatprep.subr.bf16.mxu0 0
    %421 = vmatpush2.bf16.msra.mxu0 0
    %422 = vmatprep.mubr.bf16.mxu0 0
    %423 = vmatmul.mubr.bf16.gmra.mxu0 %v323
    %v424 = vpop.f32.mrf.mxu0
    %v425 = vadd.f32 %v340, %v424
    %v426 = vpop.f32.mrf.mxu0
    %v427 = vpop.f32.mrf.mxu0
    %v428 = vadd.f32 %v340, %v427
    %v429 = vpop.f32.mrf.mxu0
    %430 = vmatprep.mubr.bf16.mxu0 0
    %431 = vmatmul.mubr.bf16.gmra.mxu0 %v324
    %v432 = vpop.f32.mrf.mxu0
    %v433 = vadd.f32 %v340, %v432
    %v434 = vpop.f32.mrf.mxu0
    %v435 = vpop.f32.mrf.mxu0
    %v436 = vadd.f32 %v340, %v435
    %v437 = vpop.f32.mrf.mxu0
    %438 = vmatprep.mubr.bf16.mxu0 0
    %439 = vmatmul.mubr.bf16.gmra.mxu0 %v325
    %v440 = vpop.f32.mrf.mxu0
    %v441 = vadd.f32 %v340, %v440
    %v442 = vpop.f32.mrf.mxu0
    %v443 = vpop.f32.mrf.mxu0
    %v444 = vadd.f32 %v340, %v443
    %v445 = vpop.f32.mrf.mxu0
    %446 = vmatprep.mubr.bf16.mxu0 0
    %447 = vmatmul.mubr.bf16.gmra.mxu0 %v326
    %v448 = vpop.f32.mrf.mxu0
    %v449 = vadd.f32 %v340, %v448
    %v450 = vpop.f32.mrf.mxu0
    %v451 = vpop.f32.mrf.mxu0
    %v452 = vadd.f32 %v340, %v451
    %v453 = vpop.f32.mrf.mxu0
    %454 = vmatprep.mubr.bf16.mxu0 0
    %455 = vmatmul.mubr.bf16.gmra.mxu0 %v327
    %v456 = vpop.f32.mrf.mxu0
    %v457 = vadd.f32 %v340, %v456
    %v458 = vpop.f32.mrf.mxu0
    %v459 = vpop.f32.mrf.mxu0
    %v460 = vadd.f32 %v340, %v459
    %v461 = vpop.f32.mrf.mxu0
    %462 = vmatprep.mubr.bf16.mxu0 0
    %463 = vmatmul.mubr.bf16.gmra.mxu0 %v328
    %v464 = vpop.f32.mrf.mxu0
    %v465 = vadd.f32 %v340, %v464
    %v466 = vpop.f32.mrf.mxu0
    %v467 = vpop.f32.mrf.mxu0
    %v468 = vadd.f32 %v340, %v467
    %v469 = vpop.f32.mrf.mxu0
    %470 = vmatprep.mubr.bf16.mxu0 0
    %471 = vmatmul.mubr.bf16.gmra.mxu0 %v329
    %v472 = vpop.f32.mrf.mxu0
    %v473 = vadd.f32 %v340, %v472
    %v474 = vpop.f32.mrf.mxu0
    %v475 = vpop.f32.mrf.mxu0
    %v476 = vadd.f32 %v340, %v475
    %v477 = vpop.f32.mrf.mxu0
    %478 = vmatprep.mubr.bf16.mxu0 0
    %479 = vmatmul.mubr.bf16.gmra.mxu0 %v330
    %v480 = vpop.f32.mrf.mxu0
    %v481 = vadd.f32 %v340, %v480
    %v482 = vpop.f32.mrf.mxu0
    %v483 = vpop.f32.mrf.mxu0
    %v484 = vadd.f32 %v340, %v483
    %v485 = vpop.f32.mrf.mxu0
    %486 = vmatprep.mubr.bf16.mxu0 0
    %487 = vmatmul.mubr.bf16.gmra.mxu0 %v331
    %v488 = vpop.f32.mrf.mxu0
    %v489 = vadd.f32 %v340, %v488
    %v490 = vpop.f32.mrf.mxu0
    %v491 = vpop.f32.mrf.mxu0
    %v492 = vadd.f32 %v340, %v491
    %v493 = vpop.f32.mrf.mxu0
    %494 = vmatprep.mubr.bf16.mxu0 0
    %495 = vmatmul.mubr.bf16.gmra.mxu0 %v332
    %v496 = vpop.f32.mrf.mxu0
    %v497 = vadd.f32 %v340, %v496
    %v498 = vpop.f32.mrf.mxu0
    %v499 = vpop.f32.mrf.mxu0
    %v500 = vadd.f32 %v340, %v499
    %v501 = vpop.f32.mrf.mxu0
    %502 = vmatprep.mubr.bf16.mxu0 0
    %503 = vmatmul.mubr.bf16.gmra.mxu0 %v333
    %v504 = vpop.f32.mrf.mxu0
    %v505 = vadd.f32 %v340, %v504
    %v506 = vpop.f32.mrf.mxu0
    %v507 = vpop.f32.mrf.mxu0
    %v508 = vadd.f32 %v340, %v507
    %v509 = vpop.f32.mrf.mxu0
    %510 = vmatprep.mubr.bf16.mxu0 0
    %511 = vmatmul.mubr.bf16.gmra.mxu0 %v334
    %v512 = vpop.f32.mrf.mxu0
    %v513 = vadd.f32 %v340, %v512
    %v514 = vpop.f32.mrf.mxu0
    %v515 = vpop.f32.mrf.mxu0
    %v516 = vadd.f32 %v340, %v515
    %v517 = vpop.f32.mrf.mxu0
    %518 = vmatprep.mubr.bf16.mxu0 0
    %519 = vmatmul.mubr.bf16.gmra.mxu0 %v335
    %v520 = vpop.f32.mrf.mxu0
    %v521 = vadd.f32 %v340, %v520
    %v522 = vpop.f32.mrf.mxu0
    %v523 = vpop.f32.mrf.mxu0
    %v524 = vpop.f32.mrf.mxu0
    %525 = vdwg.mxu0
    %v526 = vld [vmem:[#allocation2] sm:$0xf]
    %v527 = vld [vmem:[#allocation2 + $0x4] sm:$0xf]
    %v528 = vld [vmem:[#allocation2 + $0x8] sm:$0xf]
    %v529 = vld [vmem:[#allocation2 + $0xc] sm:$0xf]
    %v530 = vld [vmem:[#allocation2 + $0x10] sm:$0xf]
    %v531 = vld [vmem:[#allocation2 + $0x14] sm:$0xf]
    %v532 = vld [vmem:[#allocation2 + $0x18] sm:$0xf]
    %v533 = vld [vmem:[#allocation2 + $0x1c] sm:$0xf]
    %v534 = vld [vmem:[#allocation2 + $0x20] sm:$0xf]
    %v535 = vld [vmem:[#allocation2 + $0x24] sm:$0xf]
    %v536 = vld [vmem:[#allocation2 + $0x28] sm:$0xf]
    %v537 = vld [vmem:[#allocation2 + $0x2c] sm:$0xf]
    %v538 = vld [vmem:[#allocation2 + $0x30] sm:$0xf]
    %v539 = vld [vmem:[#allocation2 + $0x34] sm:$0xf]
    %v540 = vld [vmem:[#allocation2 + $0x38] sm:$0xf]
    %v541 = vld [vmem:[#allocation2 + $0x3c] sm:$0xf]
    %v542 = vld [vmem:[%s6] sm:$0x1]
    %v543 = vmax.f32 %v425, 0.0
    %v544 = vmax.f32 %v428, 0.0
    %v545 = vmax.f32 %v433, 0.0
    %v546 = vmax.f32 %v436, 0.0
    %v547 = vmax.f32 %v441, 0.0
    %v548 = vmax.f32 %v444, 0.0
    %v549 = vmax.f32 %v449, 0.0
    %v550 = vmax.f32 %v452, 0.0
    %v551 = vmax.f32 %v457, 0.0
    %v552 = vmax.f32 %v460, 0.0
    %v553 = vmax.f32 %v465, 0.0
    %v554 = vmax.f32 %v468, 0.0
    %v555 = vmax.f32 %v473, 0.0
    %v556 = vmax.f32 %v476, 0.0
    %v557 = vmax.f32 %v481, 0.0
    %v558 = vmax.f32 %v484, 0.0
    %v559 = vmax.f32 %v489, 0.0
    %v560 = vmax.f32 %v492, 0.0
    %v561 = vmax.f32 %v497, 0.0
    %v562 = vmax.f32 %v500, 0.0
    %v563 = vmax.f32 %v505, 0.0
    %v564 = vmax.f32 %v508, 0.0
    %v565 = vmax.f32 %v513, 0.0
    %v566 = vmax.f32 %v516, 0.0
    %v567 = vmax.f32 %v521, 0.0
    %v568 = vpack.c.bf16 %v544, %v543
    %v569 = vpack.c.bf16 %v546, %v545
    %v570 = vpack.c.bf16 %v548, %v547
    %v571 = vpack.c.bf16 %v550, %v549
    %v572 = vpack.c.bf16 %v552, %v551
    %v573 = vpack.c.bf16 %v554, %v553
    %v574 = vpack.c.bf16 %v556, %v555
    %v575 = vpack.c.bf16 %v558, %v557
    %v576 = vpack.c.bf16 %v560, %v559
    %v577 = vpack.c.bf16 %v562, %v561
    %v578 = vpack.c.bf16 %v564, %v563
    %v579 = vpack.c.bf16 %v566, %v565
    %v580 = vpack.c.bf16 %v567, %v567
    %v582 = vlaneseq
    %v583 = vshrl.u32 %v582, 7
    %v584 = vsub.s32 0, %v583
    %v585 = vrot.slane %v542, %v584
    %v603 = vunpack.c.l.b16 %v526
    %v604 = vunpack.c.l.b16 %v527
    %v605 = vunpack.c.l.b16 %v528
    %v606 = vunpack.c.l.b16 %v529
    %v607 = vunpack.c.l.b16 %v530
    %v608 = vunpack.c.l.b16 %v531
    %v609 = vunpack.c.l.b16 %v532
    %v610 = vunpack.c.l.b16 %v533
    %v611 = vunpack.c.l.b16 %v534
    %v612 = vunpack.c.l.b16 %v535
    %v613 = vunpack.c.l.b16 %v536
    %v614 = vunpack.c.l.b16 %v537
    %v615 = vunpack.c.l.b16 %v538
    %v616 = vunpack.c.l.b16 %v539
    %v617 = vunpack.c.l.b16 %v540
    %v618 = vunpack.c.l.b16 %v541
    %v619 = vpack.c.b16 %v604, %v603
    %v620 = vpack.c.b16 %v606, %v605
    %v621 = vpack.c.b16 %v608, %v607
    %v622 = vpack.c.b16 %v610, %v609
    %v623 = vpack.c.b16 %v612, %v611
    %v624 = vpack.c.b16 %v614, %v613
    %v625 = vpack.c.b16 %v616, %v615
    %v626 = vpack.c.b16 %v618, %v617
    %635 = vmatprep.subr.bf16.mxu0 0
    %636 = vmatpush1.bf16.msra.mxu0 %v626
    %637 = vmatprep.subr.bf16.mxu0 0
    %638 = vmatpush1.bf16.msra.mxu0 %v625
    %639 = vmatprep.subr.bf16.mxu0 0
    %640 = vmatpush1.bf16.msra.mxu0 %v624
    %641 = vmatprep.subr.bf16.mxu0 0
    %642 = vmatpush1.bf16.msra.mxu0 %v623
    %643 = vmatprep.subr.bf16.mxu0 0
    %644 = vmatpush1.bf16.msra.mxu0 %v622
    %645 = vmatprep.subr.bf16.mxu0 0
    %646 = vmatpush1.bf16.msra.mxu0 %v621
    %647 = vmatprep.subr.bf16.mxu0 0
    %648 = vmatpush1.bf16.msra.mxu0 %v620
    %649 = vmatprep.subr.bf16.mxu0 0
    %650 = vmatpush1.bf16.msra.mxu0 %v619
    %651 = vmatprep.subr.bf16.mxu0 0
    %652 = vmatpush2.bf16.msra.mxu0 0
    %653 = vmatprep.subr.bf16.mxu0 0
    %654 = vmatpush2.bf16.msra.mxu0 0
    %655 = vmatprep.subr.bf16.mxu0 0
    %656 = vmatpush2.bf16.msra.mxu0 0
    %657 = vmatprep.subr.bf16.mxu0 0
    %658 = vmatpush2.bf16.msra.mxu0 0
    %659 = vmatprep.subr.bf16.mxu0 0
    %660 = vmatpush2.bf16.msra.mxu0 0
    %661 = vmatprep.subr.bf16.mxu0 0
    %662 = vmatpush2.bf16.msra.mxu0 0
    %663 = vmatprep.subr.bf16.mxu0 0
    %664 = vmatpush2.bf16.msra.mxu0 0
    %665 = vmatprep.subr.bf16.mxu0 0
    %666 = vmatpush2.bf16.msra.mxu0 0
    %667 = vmatprep.mubr.bf16.mxu0 0
    %668 = vmatmul.mubr.bf16.gmra.mxu0 %v568
    %v669 = vpop.f32.mrf.mxu0
    %v670 = vadd.f32 %v585, %v669
    %v671 = vpop.f32.mrf.mxu0
    %v672 = vpop.f32.mrf.mxu0
    %v673 = vadd.f32 %v585, %v672
    %v674 = vpop.f32.mrf.mxu0
    %675 = vmatprep.mubr.bf16.mxu0 0
    %676 = vmatmul.mubr.bf16.gmra.mxu0 %v569
    %v677 = vpop.f32.mrf.mxu0
    %v678 = vadd.f32 %v585, %v677
    %v679 = vpop.f32.mrf.mxu0
    %v680 = vpop.f32.mrf.mxu0
    %v681 = vadd.f32 %v585, %v680
    %v682 = vpop.f32.mrf.mxu0
    %683 = vmatprep.mubr.bf16.mxu0 0
    %684 = vmatmul.mubr.bf16.gmra.mxu0 %v570
    %v685 = vpop.f32.mrf.mxu0
    %v686 = vadd.f32 %v585, %v685
    %v687 = vpop.f32.mrf.mxu0
    %v688 = vpop.f32.mrf.mxu0
    %v689 = vadd.f32 %v585, %v688
    %v690 = vpop.f32.mrf.mxu0
    %691 = vmatprep.mubr.bf16.mxu0 0
    %692 = vmatmul.mubr.bf16.gmra.mxu0 %v571
    %v693 = vpop.f32.mrf.mxu0
    %v694 = vadd.f32 %v585, %v693
    %v695 = vpop.f32.mrf.mxu0
    %v696 = vpop.f32.mrf.mxu0
    %v697 = vadd.f32 %v585, %v696
    %v698 = vpop.f32.mrf.mxu0
    %699 = vmatprep.mubr.bf16.mxu0 0
    %700 = vmatmul.mubr.bf16.gmra.mxu0 %v572
    %v701 = vpop.f32.mrf.mxu0
    %v702 = vadd.f32 %v585, %v701
    %v703 = vpop.f32.mrf.mxu0
    %v704 = vpop.f32.mrf.mxu0
    %v705 = vadd.f32 %v585, %v704
    %v706 = vpop.f32.mrf.mxu0
    %707 = vmatprep.mubr.bf16.mxu0 0
    %708 = vmatmul.mubr.bf16.gmra.mxu0 %v573
    %v709 = vpop.f32.mrf.mxu0
    %v710 = vadd.f32 %v585, %v709
    %v711 = vpop.f32.mrf.mxu0
    %v712 = vpop.f32.mrf.mxu0
    %v713 = vadd.f32 %v585, %v712
    %v714 = vpop.f32.mrf.mxu0
    %715 = vmatprep.mubr.bf16.mxu0 0
    %716 = vmatmul.mubr.bf16.gmra.mxu0 %v574
    %v717 = vpop.f32.mrf.mxu0
    %v718 = vadd.f32 %v585, %v717
    %v719 = vpop.f32.mrf.mxu0
    %v720 = vpop.f32.mrf.mxu0
    %v721 = vadd.f32 %v585, %v720
    %v722 = vpop.f32.mrf.mxu0
    %723 = vmatprep.mubr.bf16.mxu0 0
    %724 = vmatmul.mubr.bf16.gmra.mxu0 %v575
    %v725 = vpop.f32.mrf.mxu0
    %v726 = vadd.f32 %v585, %v725
    %v727 = vpop.f32.mrf.mxu0
    %v728 = vpop.f32.mrf.mxu0
    %v729 = vadd.f32 %v585, %v728
    %v730 = vpop.f32.mrf.mxu0
    %731 = vmatprep.mubr.bf16.mxu0 0
    %732 = vmatmul.mubr.bf16.gmra.mxu0 %v576
    %v733 = vpop.f32.mrf.mxu0
    %v734 = vadd.f32 %v585, %v733
    %v735 = vpop.f32.mrf.mxu0
    %v736 = vpop.f32.mrf.mxu0
    %v737 = vadd.f32 %v585, %v736
    %v738 = vpop.f32.mrf.mxu0
    %739 = vmatprep.mubr.bf16.mxu0 0
    %740 = vmatmul.mubr.bf16.gmra.mxu0 %v577
    %v741 = vpop.f32.mrf.mxu0
    %v742 = vadd.f32 %v585, %v741
    %v743 = vpop.f32.mrf.mxu0
    %v744 = vpop.f32.mrf.mxu0
    %v745 = vadd.f32 %v585, %v744
    %v746 = vpop.f32.mrf.mxu0
    %747 = vmatprep.mubr.bf16.mxu0 0
    %748 = vmatmul.mubr.bf16.gmra.mxu0 %v578
    %v749 = vpop.f32.mrf.mxu0
    %v750 = vadd.f32 %v585, %v749
    %v751 = vpop.f32.mrf.mxu0
    %v752 = vpop.f32.mrf.mxu0
    %v753 = vadd.f32 %v585, %v752
    %v754 = vpop.f32.mrf.mxu0
    %755 = vmatprep.mubr.bf16.mxu0 0
    %756 = vmatmul.mubr.bf16.gmra.mxu0 %v579
    %v757 = vpop.f32.mrf.mxu0
    %v758 = vadd.f32 %v585, %v757
    %v759 = vpop.f32.mrf.mxu0
    %v760 = vpop.f32.mrf.mxu0
    %v761 = vadd.f32 %v585, %v760
    %v762 = vpop.f32.mrf.mxu0
    %763 = vmatprep.mubr.bf16.mxu0 0
    %764 = vmatmul.mubr.bf16.gmra.mxu0 %v580
    %v765 = vpop.f32.mrf.mxu0
    %v766 = vadd.f32 %v585, %v765
    %v767 = vpop.f32.mrf.mxu0
    %v768 = vpop.f32.mrf.mxu0
    %v769 = vpop.f32.mrf.mxu0
    %770 = vdwg.mxu0
    %v771 = vmax.f32 %v670, 0.0
    %v772 = vmax.f32 %v673, 0.0
    %v773 = vmax.f32 %v678, 0.0
    %v774 = vmax.f32 %v681, 0.0
    %v775 = vmax.f32 %v686, 0.0
    %v776 = vmax.f32 %v689, 0.0
    %v777 = vmax.f32 %v694, 0.0
    %v778 = vmax.f32 %v697, 0.0
    %v779 = vmax.f32 %v702, 0.0
    %v780 = vmax.f32 %v705, 0.0
    %v781 = vmax.f32 %v710, 0.0
    %v782 = vmax.f32 %v713, 0.0
    %v783 = vmax.f32 %v718, 0.0
    %v784 = vmax.f32 %v721, 0.0
    %v785 = vmax.f32 %v726, 0.0
    %v786 = vmax.f32 %v729, 0.0
    %v787 = vmax.f32 %v734, 0.0
    %v788 = vmax.f32 %v737, 0.0
    %v789 = vmax.f32 %v742, 0.0
    %v790 = vmax.f32 %v745, 0.0
    %v791 = vmax.f32 %v750, 0.0
    %v792 = vmax.f32 %v753, 0.0
    %v793 = vmax.f32 %v758, 0.0
    %v794 = vmax.f32 %v761, 0.0
    %v795 = vmax.f32 %v766, 0.0
    %v796 = vpack.c.bf16 %v772, %v771
    %v797 = vpack.c.bf16 %v774, %v773
    %v798 = vpack.c.bf16 %v776, %v775
    %v799 = vpack.c.bf16 %v778, %v777
    %v800 = vpack.c.bf16 %v780, %v779
    %v801 = vpack.c.bf16 %v782, %v781
    %v802 = vpack.c.bf16 %v784, %v783
    %v803 = vpack.c.bf16 %v786, %v785
    %v804 = vpack.c.bf16 %v788, %v787
    %v805 = vpack.c.bf16 %v790, %v789
    %v806 = vpack.c.bf16 %v792, %v791
    %v807 = vpack.c.bf16 %v794, %v793
    %v808 = vpack.c.bf16 %v795, %v795
    %v809 = vld [vmem:[%s7] sm:$0xff]
    %v810 = vld [vmem:[%s7 + $0x8] sm:$0xff]
    %v811 = vld [vmem:[%s7 + $0x10] sm:$0xff]
    %v812 = vld [vmem:[%s7 + $0x18] sm:$0xff]
    %v813 = vld [vmem:[%s7 + $0x20] sm:$0xff]
    %v814 = vld [vmem:[%s7 + $0x28] sm:$0xff]
    %v815 = vld [vmem:[%s7 + $0x30] sm:$0xff]
    %v816 = vld [vmem:[%s7 + $0x38] sm:$0xff]
    %v817 = vld [vmem:[%s7 + $0x40] sm:$0xff]
    %v818 = vld [vmem:[%s7 + $0x48] sm:$0xff]
    %v819 = vld [vmem:[%s7 + $0x50] sm:$0xff]
    %v820 = vld [vmem:[%s7 + $0x58] sm:$0xff]
    %v821 = vld [vmem:[%s7 + $0x60] sm:$0xff]
    %v822 = vld [vmem:[%s7 + $0x68] sm:$0xff]
    %v823 = vld [vmem:[%s7 + $0x70] sm:$0xff]
    %v824 = vld [vmem:[%s7 + $0x78] sm:$0xff]
    %v825 = vld [vmem:[%s8] sm:$0x3]
    %v827 = vlaneseq
    %v828 = vshrl.u32 %v827, 7
    %v829 = vsub.s32 0, %v828
    %v830 = vrot.slane %v825, %v829
    %v831 = vlaneseq
    %v832 = vshrl.u32 %v831, 7
    %v833 = vsub.s32 1, %v832
    %v834 = vrot.slane %v825, %v833
    %v853 = vunpack.c.l.b16 %v809
    %v854 = vunpack.c.h.b16 %v809
    %v855 = vunpack.c.l.b16 %v810
    %v856 = vunpack.c.h.b16 %v810
    %v857 = vunpack.c.l.b16 %v811
    %v858 = vunpack.c.h.b16 %v811
    %v859 = vunpack.c.l.b16 %v812
    %v860 = vunpack.c.h.b16 %v812
    %v861 = vunpack.c.l.b16 %v813
    %v862 = vunpack.c.h.b16 %v813
    %v863 = vunpack.c.l.b16 %v814
    %v864 = vunpack.c.h.b16 %v814
    %v865 = vunpack.c.l.b16 %v815
    %v866 = vunpack.c.h.b16 %v815
    %v867 = vunpack.c.l.b16 %v816
    %v868 = vunpack.c.h.b16 %v816
    %v869 = vunpack.c.l.b16 %v817
    %v870 = vunpack.c.h.b16 %v817
    %v871 = vunpack.c.l.b16 %v818
    %v872 = vunpack.c.h.b16 %v818
    %v873 = vunpack.c.l.b16 %v819
    %v874 = vunpack.c.h.b16 %v819
    %v875 = vunpack.c.l.b16 %v820
    %v876 = vunpack.c.h.b16 %v820
    %v877 = vunpack.c.l.b16 %v821
    %v878 = vunpack.c.h.b16 %v821
    %v879 = vunpack.c.l.b16 %v822
    %v880 = vunpack.c.h.b16 %v822
    %v881 = vunpack.c.l.b16 %v823
    %v882 = vunpack.c.h.b16 %v823
    %v883 = vunpack.c.l.b16 %v824
    %v884 = vunpack.c.h.b16 %v824
    %v885 = vpack.c.b16 %v855, %v853
    %v886 = vpack.c.b16 %v856, %v854
    %v887 = vpack.c.b16 %v859, %v857
    %v888 = vpack.c.b16 %v860, %v858
    %v889 = vpack.c.b16 %v863, %v861
    %v890 = vpack.c.b16 %v864, %v862
    %v891 = vpack.c.b16 %v867, %v865
    %v892 = vpack.c.b16 %v868, %v866
    %v893 = vpack.c.b16 %v871, %v869
    %v894 = vpack.c.b16 %v872, %v870
    %v895 = vpack.c.b16 %v875, %v873
    %v896 = vpack.c.b16 %v876, %v874
    %v897 = vpack.c.b16 %v879, %v877
    %v898 = vpack.c.b16 %v880, %v878
    %v899 = vpack.c.b16 %v883, %v881
    %v900 = vpack.c.b16 %v884, %v882
    %917 = vmatprep.subr.bf16.mxu0 %v900
    %918 = vmatpush1.bf16.msra.mxu0 %v899
    %919 = vmatprep.subr.bf16.mxu0 %v898
    %920 = vmatpush1.bf16.msra.mxu0 %v897
    %921 = vmatprep.subr.bf16.mxu0 %v896
    %922 = vmatpush1.bf16.msra.mxu0 %v895
    %923 = vmatprep.subr.bf16.mxu0 %v894
    %924 = vmatpush1.bf16.msra.mxu0 %v893
    %925 = vmatprep.subr.bf16.mxu0 %v892
    %926 = vmatpush1.bf16.msra.mxu0 %v891
    %927 = vmatprep.subr.bf16.mxu0 %v890
    %928 = vmatpush1.bf16.msra.mxu0 %v889
    %929 = vmatprep.subr.bf16.mxu0 %v888
    %930 = vmatpush1.bf16.msra.mxu0 %v887
    %931 = vmatprep.subr.bf16.mxu0 %v886
    %932 = vmatpush1.bf16.msra.mxu0 %v885
    %933 = vmatprep.subr.bf16.mxu0 0
    %934 = vmatpush2.bf16.msra.mxu0 0
    %935 = vmatprep.subr.bf16.mxu0 0
    %936 = vmatpush2.bf16.msra.mxu0 0
    %937 = vmatprep.subr.bf16.mxu0 0
    %938 = vmatpush2.bf16.msra.mxu0 0
    %939 = vmatprep.subr.bf16.mxu0 0
    %940 = vmatpush2.bf16.msra.mxu0 0
    %941 = vmatprep.subr.bf16.mxu0 0
    %942 = vmatpush2.bf16.msra.mxu0 0
    %943 = vmatprep.subr.bf16.mxu0 0
    %944 = vmatpush2.bf16.msra.mxu0 0
    %945 = vmatprep.subr.bf16.mxu0 0
    %946 = vmatpush2.bf16.msra.mxu0 0
    %947 = vmatprep.subr.bf16.mxu0 0
    %948 = vmatpush2.bf16.msra.mxu0 0
    %949 = vmatprep.mubr.bf16.mxu0 0
    %950 = vmatmul.mubr.bf16.gmra.mxu0 %v796
    %v951 = vpop.f32.mrf.mxu0
    %v952 = vadd.f32 %v830, %v951
    %v953 = vpop.f32.mrf.mxu0
    %v954 = vadd.f32 %v834, %v953
    %v955 = vpop.f32.mrf.mxu0
    %v956 = vadd.f32 %v830, %v955
    %v957 = vpop.f32.mrf.mxu0
    %v958 = vadd.f32 %v834, %v957
    %959 = vmatprep.mubr.bf16.mxu0 0
    %960 = vmatmul.mubr.bf16.gmra.mxu0 %v797
    %v961 = vpop.f32.mrf.mxu0
    %v962 = vadd.f32 %v830, %v961
    %v963 = vpop.f32.mrf.mxu0
    %v964 = vadd.f32 %v834, %v963
    %v965 = vpop.f32.mrf.mxu0
    %v966 = vadd.f32 %v830, %v965
    %v967 = vpop.f32.mrf.mxu0
    %v968 = vadd.f32 %v834, %v967
    %969 = vmatprep.mubr.bf16.mxu0 0
    %970 = vmatmul.mubr.bf16.gmra.mxu0 %v798
    %v971 = vpop.f32.mrf.mxu0
    %v972 = vadd.f32 %v830, %v971
    %v973 = vpop.f32.mrf.mxu0
    %v974 = vadd.f32 %v834, %v973
    %v975 = vpop.f32.mrf.mxu0
    %v976 = vadd.f32 %v830, %v975
    %v977 = vpop.f32.mrf.mxu0
    %v978 = vadd.f32 %v834, %v977
    %979 = vmatprep.mubr.bf16.mxu0 0
    %980 = vmatmul.mubr.bf16.gmra.mxu0 %v799
    %v981 = vpop.f32.mrf.mxu0
    %v982 = vadd.f32 %v830, %v981
    %v983 = vpop.f32.mrf.mxu0
    %v984 = vadd.f32 %v834, %v983
    %v985 = vpop.f32.mrf.mxu0
    %v986 = vadd.f32 %v830, %v985
    %v987 = vpop.f32.mrf.mxu0
    %v988 = vadd.f32 %v834, %v987
    %989 = vmatprep.mubr.bf16.mxu0 0
    %990 = vmatmul.mubr.bf16.gmra.mxu0 %v800
    %v991 = vpop.f32.mrf.mxu0
    %v992 = vadd.f32 %v830, %v991
    %v993 = vpop.f32.mrf.mxu0
    %v994 = vadd.f32 %v834, %v993
    %v995 = vpop.f32.mrf.mxu0
    %v996 = vadd.f32 %v830, %v995
    %v997 = vpop.f32.mrf.mxu0
    %v998 = vadd.f32 %v834, %v997
    %999 = vmatprep.mubr.bf16.mxu0 0
    %1000 = vmatmul.mubr.bf16.gmra.mxu0 %v801
    %v1001 = vpop.f32.mrf.mxu0
    %v1002 = vadd.f32 %v830, %v1001
    %v1003 = vpop.f32.mrf.mxu0
    %v1004 = vadd.f32 %v834, %v1003
    %v1005 = vpop.f32.mrf.mxu0
    %v1006 = vadd.f32 %v830, %v1005
    %v1007 = vpop.f32.mrf.mxu0
    %v1008 = vadd.f32 %v834, %v1007
    %1009 = vmatprep.mubr.bf16.mxu0 0
    %1010 = vmatmul.mubr.bf16.gmra.mxu0 %v802
    %v1011 = vpop.f32.mrf.mxu0
    %v1012 = vadd.f32 %v830, %v1011
    %v1013 = vpop.f32.mrf.mxu0
    %v1014 = vadd.f32 %v834, %v1013
    %v1015 = vpop.f32.mrf.mxu0
    %v1016 = vadd.f32 %v830, %v1015
    %v1017 = vpop.f32.mrf.mxu0
    %v1018 = vadd.f32 %v834, %v1017
    %1019 = vmatprep.mubr.bf16.mxu0 0
    %1020 = vmatmul.mubr.bf16.gmra.mxu0 %v803
    %v1021 = vpop.f32.mrf.mxu0
    %v1022 = vadd.f32 %v830, %v1021
    %v1023 = vpop.f32.mrf.mxu0
    %v1024 = vadd.f32 %v834, %v1023
    %v1025 = vpop.f32.mrf.mxu0
    %v1026 = vadd.f32 %v830, %v1025
    %v1027 = vpop.f32.mrf.mxu0
    %v1028 = vadd.f32 %v834, %v1027
    %1029 = vmatprep.mubr.bf16.mxu0 0
    %1030 = vmatmul.mubr.bf16.gmra.mxu0 %v804
    %v1031 = vpop.f32.mrf.mxu0
    %v1032 = vadd.f32 %v830, %v1031
    %v1033 = vpop.f32.mrf.mxu0
    %v1034 = vadd.f32 %v834, %v1033
    %v1035 = vpop.f32.mrf.mxu0
    %v1036 = vadd.f32 %v830, %v1035
    %v1037 = vpop.f32.mrf.mxu0
    %v1038 = vadd.f32 %v834, %v1037
    %1039 = vmatprep.mubr.bf16.mxu0 0
    %1040 = vmatmul.mubr.bf16.gmra.mxu0 %v805
    %v1041 = vpop.f32.mrf.mxu0
    %v1042 = vadd.f32 %v830, %v1041
    %v1043 = vpop.f32.mrf.mxu0
    %v1044 = vadd.f32 %v834, %v1043
    %v1045 = vpop.f32.mrf.mxu0
    %v1046 = vadd.f32 %v830, %v1045
    %v1047 = vpop.f32.mrf.mxu0
    %v1048 = vadd.f32 %v834, %v1047
    %1049 = vmatprep.mubr.bf16.mxu0 0
    %1050 = vmatmul.mubr.bf16.gmra.mxu0 %v806
    %v1051 = vpop.f32.mrf.mxu0
    %v1052 = vadd.f32 %v830, %v1051
    %v1053 = vpop.f32.mrf.mxu0
    %v1054 = vadd.f32 %v834, %v1053
    %v1055 = vpop.f32.mrf.mxu0
    %v1056 = vadd.f32 %v830, %v1055
    %v1057 = vpop.f32.mrf.mxu0
    %v1058 = vadd.f32 %v834, %v1057
    %1059 = vmatprep.mubr.bf16.mxu0 0
    %1060 = vmatmul.mubr.bf16.gmra.mxu0 %v807
    %v1061 = vpop.f32.mrf.mxu0
    %v1062 = vadd.f32 %v830, %v1061
    %v1063 = vpop.f32.mrf.mxu0
    %v1064 = vadd.f32 %v834, %v1063
    %v1065 = vpop.f32.mrf.mxu0
    %v1066 = vadd.f32 %v830, %v1065
    %v1067 = vpop.f32.mrf.mxu0
    %v1068 = vadd.f32 %v834, %v1067
    %1069 = vmatprep.mubr.bf16.mxu0 0
    %1070 = vmatmul.mubr.bf16.gmra.mxu0 %v808
    %v1071 = vpop.f32.mrf.mxu0
    %v1072 = vadd.f32 %v830, %v1071
    %v1073 = vpop.f32.mrf.mxu0
    %v1074 = vadd.f32 %v834, %v1073
    %v1075 = vpop.f32.mrf.mxu0
    %v1076 = vpop.f32.mrf.mxu0
    %1077 = vdwg.mxu0
    %v1078 = vsub.f32 0.0, %v954
    %v1079 = vsub.f32 0.0, %v958
    %v1080 = vsub.f32 0.0, %v964
    %v1081 = vsub.f32 0.0, %v968
    %v1082 = vsub.f32 0.0, %v974
    %v1083 = vsub.f32 0.0, %v978
    %v1084 = vsub.f32 0.0, %v984
    %v1085 = vsub.f32 0.0, %v988
    %v1086 = vsub.f32 0.0, %v994
    %v1087 = vsub.f32 0.0, %v998
    %v1088 = vsub.f32 0.0, %v1004
    %v1089 = vsub.f32 0.0, %v1008
    %v1090 = vsub.f32 0.0, %v1014
    %v1091 = vsub.f32 0.0, %v1018
    %v1092 = vsub.f32 0.0, %v1024
    %v1093 = vsub.f32 0.0, %v1028
    %v1094 = vsub.f32 0.0, %v1034
    %v1095 = vsub.f32 0.0, %v1038
    %v1096 = vsub.f32 0.0, %v1044
    %v1097 = vsub.f32 0.0, %v1048
    %v1098 = vsub.f32 0.0, %v1054
    %v1099 = vsub.f32 0.0, %v1058
    %v1100 = vsub.f32 0.0, %v1064
    %v1101 = vsub.f32 0.0, %v1068
    %v1102 = vsub.f32 0.0, %v1074
    %v1103 = vsub.f32 %v49, %v952
    %v1104 = vsub.f32 %v50, %v956
    %v1105 = vsub.f32 %v51, %v962
    %v1106 = vsub.f32 %v52, %v966
    %v1107 = vsub.f32 %v53, %v972
    %v1108 = vsub.f32 %v54, %v976
    %v1109 = vsub.f32 %v55, %v982
    %v1110 = vsub.f32 %v56, %v986
    %v1111 = vsub.f32 %v57, %v992
    %v1112 = vsub.f32 %v58, %v996
    %v1113 = vsub.f32 %v59, %v1002
    %v1114 = vsub.f32 %v60, %v1006
    %v1115 = vsub.f32 %v61, %v1012
    %v1116 = vsub.f32 %v62, %v1016
    %v1117 = vsub.f32 %v63, %v1022
    %v1118 = vsub.f32 %v64, %v1026
    %v1119 = vsub.f32 %v65, %v1032
    %v1120 = vsub.f32 %v66, %v1036
    %v1121 = vsub.f32 %v67, %v1042
    %v1122 = vsub.f32 %v68, %v1046
    %v1123 = vsub.f32 %v69, %v1052
    %v1124 = vsub.f32 %v70, %v1056
    %v1125 = vsub.f32 %v71, %v1062
    %v1126 = vsub.f32 %v72, %v1066
    %v1127 = vsub.f32 %v73, %v1072
    %v1128 = vmul.f32 %v1078, 1.442695
    %v1129 = vpow.pop %v1128
    %v1130 = vmul.f32 %v1079, 1.442695
    %v1131 = vpow.pop %v1130
    %v1132 = vmul.f32 %v1080, 1.442695
    %v1133 = vpow.pop %v1132
    %v1134 = vmul.f32 %v1081, 1.442695
    %v1135 = vpow.pop %v1134
    %v1136 = vmul.f32 %v1082, 1.442695
    %v1137 = vpow.pop %v1136
    %v1138 = vmul.f32 %v1083, 1.442695
    %v1139 = vpow.pop %v1138
    %v1140 = vmul.f32 %v1084, 1.442695
    %v1141 = vpow.pop %v1140
    %v1142 = vmul.f32 %v1085, 1.442695
    %v1143 = vpow.pop %v1142
    %v1144 = vmul.f32 %v1086, 1.442695
    %v1145 = vpow.pop %v1144
    %v1146 = vmul.f32 %v1087, 1.442695
    %v1147 = vpow.pop %v1146
    %v1148 = vmul.f32 %v1088, 1.442695
    %v1149 = vpow.pop %v1148
    %v1150 = vmul.f32 %v1089, 1.442695
    %v1151 = vpow.pop %v1150
    %v1152 = vmul.f32 %v1090, 1.442695
    %v1153 = vpow.pop %v1152
    %v1154 = vmul.f32 %v1091, 1.442695
    %v1155 = vpow.pop %v1154
    %v1156 = vmul.f32 %v1092, 1.442695
    %v1157 = vpow.pop %v1156
    %v1158 = vmul.f32 %v1093, 1.442695
    %v1159 = vpow.pop %v1158
    %v1160 = vmul.f32 %v1094, 1.442695
    %v1161 = vpow.pop %v1160
    %v1162 = vmul.f32 %v1095, 1.442695
    %v1163 = vpow.pop %v1162
    %v1164 = vmul.f32 %v1096, 1.442695
    %v1165 = vpow.pop %v1164
    %v1166 = vmul.f32 %v1097, 1.442695
    %v1167 = vpow.pop %v1166
    %v1168 = vmul.f32 %v1098, 1.442695
    %v1169 = vpow.pop %v1168
    %v1170 = vmul.f32 %v1099, 1.442695
    %v1171 = vpow.pop %v1170
    %v1172 = vmul.f32 %v1100, 1.442695
    %v1173 = vpow.pop %v1172
    %v1174 = vmul.f32 %v1101, 1.442695
    %v1175 = vpow.pop %v1174
    %v1176 = vmul.f32 %v1102, 1.442695
    %v1177 = vpow.pop %v1176
    %v1178 = vmul.f32 %v1103, %v1129
    %v1179 = vmul.f32 %v1104, %v1131
    %v1180 = vmul.f32 %v1105, %v1133
    %v1181 = vmul.f32 %v1106, %v1135
    %v1182 = vmul.f32 %v1107, %v1137
    %v1183 = vmul.f32 %v1108, %v1139
    %v1184 = vmul.f32 %v1109, %v1141
    %v1185 = vmul.f32 %v1110, %v1143
    %v1186 = vmul.f32 %v1111, %v1145
    %v1187 = vmul.f32 %v1112, %v1147
    %v1188 = vmul.f32 %v1113, %v1149
    %v1189 = vmul.f32 %v1114, %v1151
    %v1190 = vmul.f32 %v1115, %v1153
    %v1191 = vmul.f32 %v1116, %v1155
    %v1192 = vmul.f32 %v1117, %v1157
    %v1193 = vmul.f32 %v1118, %v1159
    %v1194 = vmul.f32 %v1119, %v1161
    %v1195 = vmul.f32 %v1120, %v1163
    %v1196 = vmul.f32 %v1121, %v1165
    %v1197 = vmul.f32 %v1122, %v1167
    %v1198 = vmul.f32 %v1123, %v1169
    %v1199 = vmul.f32 %v1124, %v1171
    %v1200 = vmul.f32 %v1125, %v1173
    %v1201 = vmul.f32 %v1126, %v1175
    %v1202 = vmul.f32 %v1127, %v1177
    %vm1203 = vcmask 64512
    %1204 = vst.msk [vmem:[%s9] sm:$0xff] %vm1203, %v1178
    %1205 = vst.msk [vmem:[%s9 + $0x8] sm:$0xff] %vm1203, %v1179
    %1206 = vst.msk [vmem:[%s9 + $0x10] sm:$0xff] %vm1203, %v1180
    %1207 = vst.msk [vmem:[%s9 + $0x18] sm:$0xff] %vm1203, %v1181
    %1208 = vst.msk [vmem:[%s9 + $0x20] sm:$0xff] %vm1203, %v1182
    %1209 = vst.msk [vmem:[%s9 + $0x28] sm:$0xff] %vm1203, %v1183
    %1210 = vst.msk [vmem:[%s9 + $0x30] sm:$0xff] %vm1203, %v1184
    %1211 = vst.msk [vmem:[%s9 + $0x38] sm:$0xff] %vm1203, %v1185
    %1212 = vst.msk [vmem:[%s9 + $0x40] sm:$0xff] %vm1203, %v1186
    %1213 = vst.msk [vmem:[%s9 + $0x48] sm:$0xff] %vm1203, %v1187
    %1214 = vst.msk [vmem:[%s9 + $0x50] sm:$0xff] %vm1203, %v1188
    %1215 = vst.msk [vmem:[%s9 + $0x58] sm:$0xff] %vm1203, %v1189
    %1216 = vst.msk [vmem:[%s9 + $0x60] sm:$0xff] %vm1203, %v1190
    %1217 = vst.msk [vmem:[%s9 + $0x68] sm:$0xff] %vm1203, %v1191
    %1218 = vst.msk [vmem:[%s9 + $0x70] sm:$0xff] %vm1203, %v1192
    %1219 = vst.msk [vmem:[%s9 + $0x78] sm:$0xff] %vm1203, %v1193
    %1220 = vst.msk [vmem:[%s9 + $0x80] sm:$0xff] %vm1203, %v1194
    %1221 = vst.msk [vmem:[%s9 + $0x88] sm:$0xff] %vm1203, %v1195
    %1222 = vst.msk [vmem:[%s9 + $0x90] sm:$0xff] %vm1203, %v1196
    %1223 = vst.msk [vmem:[%s9 + $0x98] sm:$0xff] %vm1203, %v1197
    %1224 = vst.msk [vmem:[%s9 + $0xa0] sm:$0xff] %vm1203, %v1198
    %1225 = vst.msk [vmem:[%s9 + $0xa8] sm:$0xff] %vm1203, %v1199
    %1226 = vst.msk [vmem:[%s9 + $0xb0] sm:$0xff] %vm1203, %v1200
    %1227 = vst.msk [vmem:[%s9 + $0xb8] sm:$0xff] %vm1203, %v1201
    %1228 = vst.msk [vmem:[%s9 + $0xc0] sm:$0xff] %vm1203, %v1202
    %1229 = vst.msk [vmem:[%s10] sm:$0xff] %vm1203, %v1078
    %1230 = vst.msk [vmem:[%s10 + $0x8] sm:$0xff] %vm1203, %v1079
    %1231 = vst.msk [vmem:[%s10 + $0x10] sm:$0xff] %vm1203, %v1080
    %1232 = vst.msk [vmem:[%s10 + $0x18] sm:$0xff] %vm1203, %v1081
    %1233 = vst.msk [vmem:[%s10 + $0x20] sm:$0xff] %vm1203, %v1082
    %1234 = vst.msk [vmem:[%s10 + $0x28] sm:$0xff] %vm1203, %v1083
    %1235 = vst.msk [vmem:[%s10 + $0x30] sm:$0xff] %vm1203, %v1084
    %1236 = vst.msk [vmem:[%s10 + $0x38] sm:$0xff] %vm1203, %v1085
    %1237 = vst.msk [vmem:[%s10 + $0x40] sm:$0xff] %vm1203, %v1086
    %1238 = vst.msk [vmem:[%s10 + $0x48] sm:$0xff] %vm1203, %v1087
    %1239 = vst.msk [vmem:[%s10 + $0x50] sm:$0xff] %vm1203, %v1088
    %1240 = vst.msk [vmem:[%s10 + $0x58] sm:$0xff] %vm1203, %v1089
    %1241 = vst.msk [vmem:[%s10 + $0x60] sm:$0xff] %vm1203, %v1090
    %1242 = vst.msk [vmem:[%s10 + $0x68] sm:$0xff] %vm1203, %v1091
    %1243 = vst.msk [vmem:[%s10 + $0x70] sm:$0xff] %vm1203, %v1092
    %1244 = vst.msk [vmem:[%s10 + $0x78] sm:$0xff] %vm1203, %v1093
    %1245 = vst.msk [vmem:[%s10 + $0x80] sm:$0xff] %vm1203, %v1094
    %1246 = vst.msk [vmem:[%s10 + $0x88] sm:$0xff] %vm1203, %v1095
    %1247 = vst.msk [vmem:[%s10 + $0x90] sm:$0xff] %vm1203, %v1096
    %1248 = vst.msk [vmem:[%s10 + $0x98] sm:$0xff] %vm1203, %v1097
    %1249 = vst.msk [vmem:[%s10 + $0xa0] sm:$0xff] %vm1203, %v1098
    %1250 = vst.msk [vmem:[%s10 + $0xa8] sm:$0xff] %vm1203, %v1099
    %1251 = vst.msk [vmem:[%s10 + $0xb0] sm:$0xff] %vm1203, %v1100
    %1252 = vst.msk [vmem:[%s10 + $0xb8] sm:$0xff] %vm1203, %v1101
    %1253 = vst.msk [vmem:[%s10 + $0xc0] sm:$0xff] %vm1203, %v1102
    // Predicated region
    $region42: #{tpu_custom_call.1} parent=1 // pred_check
      _
    $region43: #{tpu_custom_call.1} parent=1 // pred_check_branch
      %1255 = sbr.rel (0) target = $region45
    $region44: #{tpu_custom_call.1} parent=1 // pred_region
      _
    $region45: #{tpu_custom_call.1} parent=1 // pred_fallthru
      _
    // Predicated region
    $region46: #{tpu_custom_call.1} parent=1 // pred_check
      _
    $region47: #{tpu_custom_call.1} parent=1 // pred_check_branch
      %1257 = sbr.rel (0) target = $region49
    $region48: #{tpu_custom_call.1} parent=1 // pred_region
      _
    $region49: #{tpu_custom_call.1} parent=1 // pred_fallthru
      _
    // Predicated region
    $region50: #{tpu_custom_call.1} parent=1 // pred_check
      _
    $region51: #{tpu_custom_call.1} parent=1 // pred_check_branch
      %1259 = sbr.rel (0) target = $region53
    $region52: #{tpu_custom_call.1} parent=1 // pred_region
      _
    $region53: #{tpu_custom_call.1} parent=1 // pred_fallthru
      _
    // Predicated region
    $region54: #{tpu_custom_call.1} parent=1 // pred_check
      _
    $region55: #{tpu_custom_call.1} parent=1 // pred_check_branch
      %1261 = sbr.rel (0) target = $region57
    $region56: #{tpu_custom_call.1} parent=1 // pred_region
      _
    $region57: #{tpu_custom_call.1} parent=1 // pred_fallthru
      _
    %1262 = vsyncpa [#allocation3], 1

</llo_original>
